<compile_context>
chip_gen: v5e
topology: v5e:2x2
jax: 0.10.0
libtpu: 0.0.40
codegen_flags: <defaults>
</compile_context>

<pallas_src>
import functools

import jax
import jax.numpy as jnp
from jax.experimental import pallas as pl
from jax.experimental.pallas import tpu as pltpu


def _pick_hw_tile(hw: int, d: int, n: int,
                  vmem_budget_bytes: int = 20 << 20) -> int:
    """Lane-dense (multiple-of-128) spatial tile sized to a VMEM budget.

    Budget covers the double-buffered per-step streams:
    x (D,T) in, weighted (D,T) out, sim (N,T) out, wmax (1,T) out, all f32.
    """
    per_lane_bytes = 2 * 4 * (2 * d + n + 1)
    cap = max(128, (vmem_budget_bytes // per_lane_bytes) // 128 * 128)
    hw128 = ((hw + 127) // 128) * 128
    for t in (4096, 2048, 1024, 512, 256, 128):
        if t <= cap and 2 * t <= hw128:    # keep >= 2 pipeline steps
            return t
    return min(hw128, cap)                 # tiny images: one lane-dense tile


# ----------------------------------------------------------------------------
# Kernel
# ----------------------------------------------------------------------------
def _single_key_attention_kernel(
    x_ref,        # (1, D, T)  assp features, spatially-flattened lane tile
    a_ref,        # (1, N, D)  q_flat @ Wk  (key conv folded into similarity)
    bias_ref,     # (1, N, 1)  q_flat @ bk
    weighted_ref, # (1, D, T)  assp_features * similarityWeihtMax
    sim_ref,      # (1, N, T)  similarityCat (flattened spatial)
    wmax_ref,     # (1, 1, T)  similarityWeihtMax
    *,
    softmax_scale: float,     # n_cluster / N
):
    x = x_ref[0]              # (D, T)
    a = a_ref[0]              # (N, D)
    bias = bias_ref[0]        # (N, 1)

    # sim = q @ (Wk @ x + bk) == (q @ Wk) @ x + (q @ bk) == a @ x + bias
    sim = jnp.dot(a, x, preferred_element_type=jnp.float32) + bias   # (N, T)

    # Softmax over the N similarity channels, scaled by K / N.
    # Only the normalizer is needed: max_n(softmax) = exp(0) / sum(e) = 1/sum(e).
    scaled = sim * softmax_scale
    m = jnp.max(scaled, axis=0, keepdims=True)                       # (1, T)
    s = jnp.sum(jnp.exp(scaled - m), axis=0, keepdims=True)          # (1, T)
    wmax = pl.reciprocal(s)                                          # exact

    weighted_ref[0] = (x * wmax).astype(weighted_ref.dtype)
    sim_ref[0] = sim.astype(sim_ref.dtype)
    wmax_ref[0] = wmax.astype(wmax_ref.dtype)


# ----------------------------------------------------------------------------
# Wrapper
# ----------------------------------------------------------------------------
@jax.jit
def single_key_attention_forward(assp_features, prototypes, wk, bk, wq, bq):
    """DomainTrain=False forward pass of SingleKeyAttention."""
    # TODO(synk): DomainTrain=True branch (host-side np.random pixel sampling +
    # nearest-prototype replacement) is data-dependent host logic and is not
    # implemented in the kernel.
    B, D, H, W = assp_features.shape
    _, C, K, _ = prototypes.shape
    Q = wk.shape[0]
    HW = H * W
    N = C * K

    # --- spatial-tile-invariant query work, hoisted out of the grid loop ----
    q = jnp.einsum("bckd,cqd->bckq", prototypes.astype(jnp.float32),
                   wq.astype(jnp.float32)) + bq[None, :, None, :]
    q_flat = q.reshape(B, N, Q)                                   # prototypesOut
    a = jnp.einsum("bnq,qd->bnd", q_flat, wk.astype(jnp.float32))  # (B, N, D)
    sim_bias = jnp.einsum("bnq,q->bn", q_flat,
                          bk.astype(jnp.float32))[..., None]       # (B, N, 1)

    # --- lane-dense spatial tiling (pad HW up to a multiple of T) -----------
    T = _pick_hw_tile(HW, D, N)
    HW_pad = ((HW + T - 1) // T) * T
    n_t = HW_pad // T

    x_flat = assp_features.reshape(B, D, HW)
    if HW_pad != HW:
        x_flat = jnp.pad(x_flat, ((0, 0), (0, 0), (0, HW_pad - HW)))

    out_shapes = (
        jax.ShapeDtypeStruct((B, D, HW_pad), assp_features.dtype),  # weighted
        jax.ShapeDtypeStruct((B, N, HW_pad), jnp.float32),          # similarityCat
        jax.ShapeDtypeStruct((B, 1, HW_pad), jnp.float32),          # weight max
    )

    grid_spec = pltpu.PrefetchScalarGridSpec(
        num_scalar_prefetch=0,
        grid=(B, n_t),
        in_specs=[
            pl.BlockSpec((1, D, T), lambda b, t: (b, 0, t)),
            pl.BlockSpec((1, N, D), lambda b, t: (b, 0, 0)),
            pl.BlockSpec((1, N, 1), lambda b, t: (b, 0, 0)),
        ],
        out_specs=[
            pl.BlockSpec((1, D, T), lambda b, t: (b, 0, t)),
            pl.BlockSpec((1, N, T), lambda b, t: (b, 0, t)),
            pl.BlockSpec((1, 1, T), lambda b, t: (b, 0, t)),
        ],
    )

    kernel = functools.partial(_single_key_attention_kernel,
                               softmax_scale=float(K) / float(N))

    weighted, sim, wmax = pl.pallas_call(
        kernel,
        out_shape=out_shapes,
        grid_spec=grid_spec,
        compiler_params=pltpu.CompilerParams(
            # No output block revisited across either axis -> both parallel
            # (v7x: shards spatial tiles across both TensorCores even at B=1).
            dimension_semantics=("parallel", "parallel"),
            vmem_limit_bytes=32 * 1024 * 1024,
        ),
    )(x_flat, a, sim_bias)

    assp_weighted = weighted[:, :, :HW].reshape(B, D, H, W)
    similarityCat = sim[:, :, :HW].reshape(B, N, H, W)
    similarityWeihtMax = wmax[:, 0, :HW].reshape(B, H, W)
    # mean over softmax channels is exactly 1/N (softmax normalization).
    similarityWeihtMean = jnp.full((B, H, W), 1.0 / float(N), jnp.float32)
    return (assp_weighted, q_flat, similarityWeihtMax, similarityCat,
            similarityWeihtMean)


def single_key_attention(assp_features, prototypes, params):
    """Returns the same 5-tuple structure as the PyTorch module."""
    wk, bk, wq, bq = params
    (assp_weighted, q_out, sim_max, sim_cat,
     sim_mean) = single_key_attention_forward(assp_features, prototypes,
                                              wk, bk, wq, bq)
    N = q_out.shape[1]
    prototypes_out = [q_out[:, n, :] for n in range(N)]  # list of (B, Q)
    return (assp_weighted, prototypes_out, sim_max, sim_cat,
            [sim_cat, sim_mean, sim_max])


# ----------------------------------------------------------------------------
# Pure-JAX reference (unfused math, for correctness check)
# ----------------------------------------------------------------------------
def _reference_forward(x, proto, wk, bk, wq, bq):
    B, D, H, W = x.shape
    C, K = proto.shape[1], proto.shape[2]
    Q = wk.shape[0]
    N = C * K
    key_out = jnp.einsum("qd,bdhw->bqhw", wk, x) + bk.reshape(1, Q, 1, 1)
    key_flat = key_out.reshape(B, Q, H * W)
    q = jnp.einsum("bckd,cqd->bckq", proto, wq) + bq.reshape(1, C, 1, Q)
    q_flat = q.reshape(B, N, Q)
    sim = jnp.einsum("bnq,bqs->bns", q_flat, key_flat)
    scaled = sim / float(N) * float(K)
    w = jax.nn.softmax(scaled, axis=1)
    wmax = jnp.max(w, axis=1)
    wmean = jnp.mean(w, axis=1)
    weighted = x * wmax.reshape(B, 1, H, W)
    return (weighted, q_flat, sim.reshape(B, N, H, W),
            wmax.reshape(B, H, W), wmean.reshape(B, H, W))


# ----------------------------------------------------------------------------
# Main
# ----------------------------------------------------------------------------
if __name__ == "__main__":
    featDim = 32
    num_classes = 3
    n_cluster = 2
    H = W = 16
    B = 2
    Q = 128   # fixed query/key width of the 1x1 convs in the module

    key = jax.random.PRNGKey(0)
    k_x, k_p, k_wk, k_bk, k_wq, k_bq = jax.random.split(key, 6)

    assp_features = jax.random.normal(k_x, (B, featDim, H, W), jnp.float32)
    prototypes = jax.random.normal(k_p, (B, num_classes, n_cluster, featDim),
                                   jnp.float32)

    # Deterministic Conv2d-1x1-like parameter init
    scale = 1.0 / (featDim ** 0.5)
    wk = jax.random.uniform(k_wk, (Q, featDim), jnp.float32, -scale, scale)
    bk = jax.random.uniform(k_bk, (Q,), jnp.float32, -scale, scale)
    wq = jax.random.uniform(k_wq, (num_classes, Q, featDim), jnp.float32,
                            -scale, scale)
    bq = jax.random.uniform(k_bq, (num_classes, Q), jnp.float32, -scale, scale)

    outs = single_key_attention(assp_features, prototypes, (wk, bk, wq, bq))
    assp_weighted, prototypes_out, sim_max, sim_cat, extra = outs
    jax.block_until_ready(assp_weighted)

    # Verify against pure-JAX reference.
    ref_w, ref_q, ref_sim, ref_max, ref_mean = _reference_forward(
        assp_features, prototypes, wk, bk, wq, bq)

    # Kernel uses a re-associated matmul (key conv folded) -> rounding-level diff.
    assert jnp.allclose(sim_cat, ref_sim, rtol=1e-3, atol=1e-3)
    assert jnp.allclose(jnp.stack(prototypes_out, axis=1), ref_q,
                        rtol=1e-3, atol=1e-3)
    assert jnp.allclose(sim_max, ref_max, rtol=1e-3, atol=1e-4)
    assert jnp.allclose(extra[1], ref_mean, rtol=1e-4, atol=1e-5)
    assert jnp.allclose(assp_weighted, ref_w, rtol=1e-3, atol=1e-4)

    print("KERNEL_OK")
</pallas_src>

<mosaic_0001>
module attributes {stable_mosaic.version = 11 : i64} {
  func.func @_single_key_attention_kernel(%arg0: i32, %arg1: i32, %arg2: memref<1x32x128xf32, #tpu.memory_space<vmem>>, %arg3: memref<1x6x32xf32, #tpu.memory_space<vmem>>, %arg4: memref<1x6x1xf32, #tpu.memory_space<vmem>>, %arg5: memref<1x32x128xf32, #tpu.memory_space<vmem>>, %arg6: memref<1x6x128xf32, #tpu.memory_space<vmem>>, %arg7: memref<1x1x128xf32, #tpu.memory_space<vmem>>) attributes {dimension_semantics = [#tpu.dimension_semantics<parallel>, #tpu.dimension_semantics<parallel>], iteration_bounds = array<i64: 2, 2>, scalar_prefetch = 0 : i64, scratch_operands = 0 : i64, tpu.core_type = #tpu.core_type<tc>, window_params = [{transform_indices = @transform_0, window_bounds = array<i64: 1, 32, 128>}, {transform_indices = @transform_1, window_bounds = array<i64: 1, 6, 32>}, {transform_indices = @transform_2, window_bounds = array<i64: 1, 6, 1>}, {transform_indices = @transform_3, window_bounds = array<i64: 1, 32, 128>}, {transform_indices = @transform_4, window_bounds = array<i64: 1, 6, 128>}, {transform_indices = @transform_5, window_bounds = array<i64: 1, 1, 128>}]} {
    %c0 = arith.constant 0 : index
    %c0_0 = arith.constant 0 : index
    %c0_1 = arith.constant 0 : index
    %0 = vector.load %arg2[%c0, %c0_0, %c0_1] : memref<1x32x128xf32, #tpu.memory_space<vmem>>, vector<1x32x128xf32>
    %1 = vector.shape_cast %0 : vector<1x32x128xf32> to vector<32x128xf32>
    %c0_2 = arith.constant 0 : index
    %c0_3 = arith.constant 0 : index
    %c0_4 = arith.constant 0 : index
    %2 = vector.load %arg3[%c0_2, %c0_3, %c0_4] : memref<1x6x32xf32, #tpu.memory_space<vmem>>, vector<1x6x32xf32>
    %3 = vector.shape_cast %2 : vector<1x6x32xf32> to vector<6x32xf32>
    %c0_5 = arith.constant 0 : index
    %c0_6 = arith.constant 0 : index
    %c0_7 = arith.constant 0 : index
    %4 = vector.load %arg4[%c0_5, %c0_6, %c0_7] : memref<1x6x1xf32, #tpu.memory_space<vmem>>, vector<1x6x1xf32>
    %5 = vector.shape_cast %4 : vector<1x6x1xf32> to vector<6x1xf32>
    %cst = arith.constant dense<0.000000e+00> : vector<6x128xf32>
    %6 = tpu.matmul %3, %1, %cst {dimension_numbers = #tpu.dot_dimension_numbers<[1], [0], [0], [1], [0, 0, 1, 1], [], []>} : vector<6x32xf32>, vector<32x128xf32>, vector<6x128xf32> -> vector<6x128xf32>
    %7 = vector.broadcast %5 : vector<6x1xf32> to vector<6x128xf32>
    %8 = arith.addf %6, %7 : vector<6x128xf32>
    %cst_8 = arith.constant 0.333333343 : f32
    %9 = vector.broadcast %cst_8 : f32 to vector<6x128xf32>
    %10 = arith.mulf %8, %9 : vector<6x128xf32>
    %cst_9 = arith.constant dense<0xFF800000> : vector<128xf32>
    %11 = vector.multi_reduction <maximumf>, %10, %cst_9 [0] : vector<6x128xf32> to vector<128xf32>
    %12 = vector.shape_cast %11 : vector<128xf32> to vector<1x128xf32>
    %13 = vector.broadcast %12 : vector<1x128xf32> to vector<6x128xf32>
    %14 = arith.subf %10, %13 : vector<6x128xf32>
    %15 = math.exp %14 : vector<6x128xf32>
    %cst_10 = arith.constant dense<0.000000e+00> : vector<128xf32>
    %16 = vector.multi_reduction <add>, %15, %cst_10 [0] : vector<6x128xf32> to vector<128xf32>
    %17 = vector.shape_cast %16 : vector<128xf32> to vector<1x128xf32>
    %18 = tpu.reciprocal %17 : vector<1x128xf32> -> vector<1x128xf32>
    %19 = vector.broadcast %18 : vector<1x128xf32> to vector<32x128xf32>
    %20 = arith.mulf %1, %19 : vector<32x128xf32>
    %c0_11 = arith.constant 0 : index
    %c0_12 = arith.constant 0 : index
    %c0_13 = arith.constant 0 : index
    %21 = vector.load %arg5[%c0_11, %c0_12, %c0_13] : memref<1x32x128xf32, #tpu.memory_space<vmem>>, vector<1x32x128xf32>
    %22 = vector.shape_cast %21 : vector<1x32x128xf32> to vector<32x128xf32>
    %23 = vector.shape_cast %20 : vector<32x128xf32> to vector<1x32x128xf32>
    tpu.vector_store %arg5[%c0_11, %c0_12, %c0_13], %23 {strides = array<i32>} : memref<1x32x128xf32, #tpu.memory_space<vmem>>, vector<1x32x128xf32>,
    %c0_14 = arith.constant 0 : index
    %c0_15 = arith.constant 0 : index
    %c0_16 = arith.constant 0 : index
    %24 = vector.load %arg6[%c0_14, %c0_15, %c0_16] : memref<1x6x128xf32, #tpu.memory_space<vmem>>, vector<1x6x128xf32>
    %25 = vector.shape_cast %24 : vector<1x6x128xf32> to vector<6x128xf32>
    %26 = vector.shape_cast %8 : vector<6x128xf32> to vector<1x6x128xf32>
    tpu.vector_store %arg6[%c0_14, %c0_15, %c0_16], %26 {strides = array<i32>} : memref<1x6x128xf32, #tpu.memory_space<vmem>>, vector<1x6x128xf32>,
    %c0_17 = arith.constant 0 : index
    %c0_18 = arith.constant 0 : index
    %c0_19 = arith.constant 0 : index
    %27 = vector.load %arg7[%c0_17, %c0_18, %c0_19] : memref<1x1x128xf32, #tpu.memory_space<vmem>>, vector<1x1x128xf32>
    %28 = vector.shape_cast %27 : vector<1x1x128xf32> to vector<1x128xf32>
    %29 = vector.shape_cast %18 : vector<1x128xf32> to vector<1x1x128xf32>
    tpu.vector_store %arg7[%c0_17, %c0_18, %c0_19], %29 {strides = array<i32>} : memref<1x1x128xf32, #tpu.memory_space<vmem>>, vector<1x1x128xf32>,
    return
  }
  func.func @transform_0(%arg0: i32, %arg1: i32) -> (i32, i32, i32) {
    %c0_i32 = arith.constant 0 : i32
    %c0_i32_0 = arith.constant 0 : i32
    return %arg0, %c0_i32, %arg1 : i32, i32, i32
  }
  func.func @transform_1(%arg0: i32, %arg1: i32) -> (i32, i32, i32) {
    %c0_i32 = arith.constant 0 : i32
    %c0_i32_0 = arith.constant 0 : i32
    %c0_i32_1 = arith.constant 0 : i32
    return %arg0, %c0_i32, %c0_i32_0 : i32, i32, i32
  }
  func.func @transform_2(%arg0: i32, %arg1: i32) -> (i32, i32, i32) {
    %c0_i32 = arith.constant 0 : i32
    %c0_i32_0 = arith.constant 0 : i32
    %c0_i32_1 = arith.constant 0 : i32
    return %arg0, %c0_i32, %c0_i32_0 : i32, i32, i32
  }
  func.func @transform_3(%arg0: i32, %arg1: i32) -> (i32, i32, i32) {
    %c0_i32 = arith.constant 0 : i32
    %c0_i32_0 = arith.constant 0 : i32
    return %arg0, %c0_i32, %arg1 : i32, i32, i32
  }
  func.func @transform_4(%arg0: i32, %arg1: i32) -> (i32, i32, i32) {
    %c0_i32 = arith.constant 0 : i32
    %c0_i32_0 = arith.constant 0 : i32
    return %arg0, %c0_i32, %arg1 : i32, i32, i32
  }
  func.func @transform_5(%arg0: i32, %arg1: i32) -> (i32, i32, i32) {
    %c0_i32 = arith.constant 0 : i32
    %c0_i32_0 = arith.constant 0 : i32
    return %arg0, %c0_i32, %arg1 : i32, i32, i32
  }
}

</mosaic_0001>

<llo_original>
// kernel: squeeze.1
$region0: #{squeeze.1}
  %s0 = inlined_call_operand.vmem [shape: f32[2,256], index: 0, kind: input, shape index: {}]
  %s1 = inlined_call_operand.hbm [shape: f32[2,16,16], index: 1, kind: output, shape index: {}]
  $region1: #{squeeze.1} parent=0
    #allocation0 [shape = 'u8[16384]{0}', space=vmem, size = 0x4000, scoped, tag = 'operand span for operand 1']
    #allocation1 [shape = 's32[1]{0}', space=sflag, size = 0x4, scoped, tag = 'scoped memory for squeeze.1']
    #allocation2 [shape = 'u8[8192]{0}', space=vmem, size = 0x2000, scoped, tag = 'scoped mem for input reshape']
    %2 = vsyncpa [#allocation1], 0
    %s4 = ssub.s32 4, 1
    %s5 = scalar_lea.vmem %s0, 2
    %v6 = vld [vmem:[%s5] sm:%s4]
    %s7 = scalar_lea.vmem [#allocation2], 8
    %8 = vst [vmem:[%s7] sm:%s4] %v6
    %v9 = vld [vmem:[%s0] sm:%s4]
    %10 = vst [vmem:[#allocation2] sm:%s4] %v9
    %v11 = vld [vmem:[#allocation2] sm:$0x3]
    %vm12 = vcmask 130048
    %13 = vst.msk [vmem:[#allocation0] ss:$16 sm:$0x3] %vm12, %v11
    %s14 = scalar_lea.vmem [#allocation2], 8
    %v15 = vld [vmem:[%s14] sm:$0x3]
    %vm16 = vcmask 130048
    %s17 = scalar_lea.vmem [#allocation0], 8
    %18 = vst.msk [vmem:[%s17] ss:$16 sm:$0x3] %vm16, %v15
    %v19 = vld.sshfl [vmem:[#allocation2] sm:$0xff pattern:$0x99999180]
    %20 = vrot.lane.b32.xlu0 %v19, 112
    %v21 = vpop.permute.xlu0 %20
    %vm22 = vcmask 130048
    %s23 = scalar_lea.vmem [#allocation0], 1
    %24 = vst.msk [vmem:[%s23] ss:$8 sm:$0xf] %vm22, %v21
    %v25 = vld.sshfl [vmem:[#allocation2] sm:$0xff pattern:$0x99999180]
    %26 = vrot.lane.b32.xlu0 %v25, 96
    %v27 = vpop.permute.xlu0 %26
    %vm28 = vcmask 130048
    %s29 = scalar_lea.vmem [#allocation0], 2
    %30 = vst.msk [vmem:[%s29] ss:$8 sm:$0xf] %vm28, %v27
    %v31 = vld.sshfl [vmem:[#allocation2] sm:$0xff pattern:$0x99999180]
    %32 = vrot.lane.b32.xlu0 %v31, 80
    %v33 = vpop.permute.xlu0 %32
    %vm34 = vcmask 130048
    %s35 = scalar_lea.vmem [#allocation0], 3
    %36 = vst.msk [vmem:[%s35] ss:$8 sm:$0xf] %vm34, %v33
    %v37 = vld.sshfl [vmem:[#allocation2] sm:$0xff pattern:$0x99999180]
    %38 = vrot.lane.b32.xlu0 %v37, 64
    %v39 = vpop.permute.xlu0 %38
    %vm40 = vcmask 130048
    %s41 = scalar_lea.vmem [#allocation0], 4
    %42 = vst.msk [vmem:[%s41] ss:$8 sm:$0xf] %vm40, %v39
    %v43 = vld.sshfl [vmem:[#allocation2] sm:$0xff pattern:$0x99999180]
    %44 = vrot.lane.b32.xlu0 %v43, 48
    %v45 = vpop.permute.xlu0 %44
    %vm46 = vcmask 130048
    %s47 = scalar_lea.vmem [#allocation0], 5
    %48 = vst.msk [vmem:[%s47] ss:$8 sm:$0xf] %vm46, %v45
    %v49 = vld.sshfl [vmem:[#allocation2] sm:$0xff pattern:$0x99999180]
    %50 = vrot.lane.b32.xlu0 %v49, 32
    %v51 = vpop.permute.xlu0 %50
    %vm52 = vcmask 130048
    %s53 = scalar_lea.vmem [#allocation0], 6
    %54 = vst.msk [vmem:[%s53] ss:$8 sm:$0xf] %vm52, %v51
    %v55 = vld.sshfl [vmem:[#allocation2] sm:$0xff pattern:$0x99999180]
    %56 = vrot.lane.b32.xlu0 %v55, 16
    %v57 = vpop.permute.xlu0 %56
    %vm58 = vcmask 130048
    %s59 = scalar_lea.vmem [#allocation0], 7
    %60 = vst.msk [vmem:[%s59] ss:$8 sm:$0xf] %vm58, %v57
    %62 = vsyncadd [#allocation1], 0
    %s64 = sshll.u32 [#allocation0], 4
    %s65 = int_to_ptr.vmem [resolvable:$true] %s64
    %s66 = sshll.u32 %s1, 4
    %s67 = int_to_ptr.hbm [resolvable:$true] %s66
    %69 = dma.vmem_to_hbm [thread:$0]  %s65, 512, %s67, [#allocation1]
    %71 = dma.done [#allocation1], 512
    %72 = vsyncpa [#allocation1], 1

// kernel: single_key_attention_forward.1
$region0: #{single_key_attention_forward.1}
  #allocation0 [shape = 'u32[]', space=smem, size = 0x4, offset = 0x4, fixed_abs, tag = 'smem constant byte address 0x4 - core index']
  #allocation1 [shape = 'u32[72,128]{1,0:T(1,128)}', space=vmem, size = 0x9000, scoped, tag = 'internal scratch']
  %s0 = inlined_call_operand.vmem [shape: f32[2,32,256], index: 0, kind: input, shape index: {}]
  %s1 = inlined_call_operand.vmem [shape: f32[2,6,32], index: 1, kind: input, shape index: {}]
  %s2 = inlined_call_operand.vmem [shape: f32[2,6,1], index: 2, kind: input, shape index: {}]
  %s3 = inlined_call_operand.vmem [shape: f32[2,32,256], index: 3, kind: output, shape index: {0}]
  %s4 = inlined_call_operand.vmem [shape: f32[2,6,256], index: 4, kind: output, shape index: {1}]
  %s5 = inlined_call_operand.vmem [shape: f32[2,1,256], index: 5, kind: output, shape index: {2}]
  %6 = xla_tuple %s3, %s4, %s5
  %s7 = sld [smem:[#allocation0]]
  $region133: #{single_key_attention_forward.1} parent=0
    _
  %s9 = ssub.s32 1, %s7
  %s10 = scalar_select 0, %s9, %s7
  $region1: #{single_key_attention_forward.1} parent=0
    #allocation2 [shape = 'u8[32768]{0}', space=vmem, size = 0x8000, scoped, tag = 'input window, operand 0']
    #allocation3 [shape = 'u8[32768]{0}', space=vmem, size = 0x8000, scoped, tag = 'output window, operand 0']
    loop: start=0, step=1, limit=6
    $region2: #{single_key_attention_forward.1} parent=1 // loop_pre_header
      _
    $region3: #{single_key_attention_forward.1} parent=1 // loop_header
      %s12 = sphi 0, %s16
      %p13 = scmp.ge.s32.totalorder %s12, 6
      %s19 = sphi 0, %s31
      %s20 = sphi 0, %s27
      %s21 = sphi 0, %s19
      %s22 = sphi 0, %s20
      %s23 = sphi 0, %s21
      %s24 = sphi 0, %s22
      %s36 = sphi 0, %s38
      %s39 = sphi 0, %s36
      %s40 = sphi 0, %s39
      %s56 = sphi 0, %s40
      %s62 = sphi 0, %s64
      %s65 = sphi 0, %s62
      %s66 = sphi 0, %s65
      %s82 = sphi 0, %s66
      %s88 = sphi 0, %s90
      %s91 = sphi 0, %s88
      %s92 = sphi 0, %s91
      %s108 = sphi 0, %s92
      %s116 = sphi 0, %s118
      %s119 = sphi 0, %s116
      %s120 = sphi 0, %s119
      %s136 = sphi 0, %s120
      %s144 = sphi 0, %s146
      %s147 = sphi 0, %s144
      %s148 = sphi 0, %s147
      %s164 = sphi 0, %s148
      %s172 = sphi 0, %s174
      %s175 = sphi 0, %s172
      %s176 = sphi 0, %s175
      %s192 = sphi 0, %s176
    $region4: #{single_key_attention_forward.1} parent=1 // loop_header_branch
      %15 = sbr.rel (%p13) target = $region8
    $region5: #{single_key_attention_forward.1} parent=1 // loop_body
      %s17 = ssub.s32 %s12, 1
      %s18 = ssub.s32 %s12, 2
      %s25 = sadd.s32 1, %s20
      %p26 = scmp.ge.s32.totalorder %s25, 2
      %s27 = scalar_select %p26, 0, %s25
      %s28 = sadd.s32 1, %s19
      %s29 = scalar_select %p26, %s28, %s19
      %p30 = scmp.ge.s32.totalorder %s29, 2
      %s31 = scalar_select %p30, 0, %s29
      %s32 = ssub.s32 %s19, %s31
      %s33 = ssub.s32 %s20, %s27
      %s34 = sor.u32 %s32, %s33
      %p35 = scmp.eq.s32.totalorder %s34, 0
      %s37 = sadd.s32 %s36, 1
      %s38 = scalar_select %p35, %s36, %s37
      %p41 = pneg %p35
      %p42 = scmp.eq.s32.totalorder %s12, 3
      %p43 = por %p41, %p42
      %p44 = scmp.ne.s32.totalorder %s36, %s39
      %p45 = scmp.eq.s32.totalorder %s12, 0
      %p46 = por %p44, %p45
      %p47 = scmp.ne.s32.totalorder %s36, %s39
      %p48 = scmp.eq.s32.totalorder %s17, 3
      %p49 = por %p47, %p48
      %p50 = scmp.ne.s32.totalorder %s39, %s40
      %p51 = scmp.eq.s32.totalorder %s17, 0
      %p52 = por %p50, %p51
      %p53 = scmp.ne.s32.totalorder %s39, %s40
      %p54 = scmp.eq.s32.totalorder %s18, 3
      %p55 = por %p53, %p54
      %p57 = scmp.ne.s32.totalorder %s40, %s56
      %p58 = scmp.eq.s32.totalorder %s18, 0
      %p59 = por %p57, %p58
      %s60 = ssub.s32 %s19, %s31
      %p61 = scmp.eq.s32.totalorder %s60, 0
      %s63 = sadd.s32 %s62, 1
      %s64 = scalar_select %p61, %s62, %s63
      %p67 = pneg %p61
      %p68 = scmp.eq.s32.totalorder %s12, 3
      %p69 = por %p67, %p68
      %p70 = scmp.ne.s32.totalorder %s62, %s65
      %p71 = scmp.eq.s32.totalorder %s12, 0
      %p72 = por %p70, %p71
      %p73 = scmp.ne.s32.totalorder %s62, %s65
      %p74 = scmp.eq.s32.totalorder %s17, 3
      %p75 = por %p73, %p74
      %p76 = scmp.ne.s32.totalorder %s65, %s66
      %p77 = scmp.eq.s32.totalorder %s17, 0
      %p78 = por %p76, %p77
      %p79 = scmp.ne.s32.totalorder %s65, %s66
      %p80 = scmp.eq.s32.totalorder %s18, 3
      %p81 = por %p79, %p80
      %p83 = scmp.ne.s32.totalorder %s66, %s82
      %p84 = scmp.eq.s32.totalorder %s18, 0
      %p85 = por %p83, %p84
      %s86 = ssub.s32 %s19, %s31
      %p87 = scmp.eq.s32.totalorder %s86, 0
      %s89 = sadd.s32 %s88, 1
      %s90 = scalar_select %p87, %s88, %s89
      %p93 = pneg %p87
      %p94 = scmp.eq.s32.totalorder %s12, 3
      %p95 = por %p93, %p94
      %p96 = scmp.ne.s32.totalorder %s88, %s91
      %p97 = scmp.eq.s32.totalorder %s12, 0
      %p98 = por %p96, %p97
      %p99 = scmp.ne.s32.totalorder %s88, %s91
      %p100 = scmp.eq.s32.totalorder %s17, 3
      %p101 = por %p99, %p100
      %p102 = scmp.ne.s32.totalorder %s91, %s92
      %p103 = scmp.eq.s32.totalorder %s17, 0
      %p104 = por %p102, %p103
      %p105 = scmp.ne.s32.totalorder %s91, %s92
      %p106 = scmp.eq.s32.totalorder %s18, 3
      %p107 = por %p105, %p106
      %p109 = scmp.ne.s32.totalorder %s92, %s108
      %p110 = scmp.eq.s32.totalorder %s18, 0
      %p111 = por %p109, %p110
      %s112 = ssub.s32 %s19, %s31
      %s113 = ssub.s32 %s20, %s27
      %s114 = sor.u32 %s112, %s113
      %p115 = scmp.eq.s32.totalorder %s114, 0
      %s117 = sadd.s32 %s116, 1
      %s118 = scalar_select %p115, %s116, %s117
      %p121 = pneg %p115
      %p122 = scmp.eq.s32.totalorder %s12, 3
      %p123 = por %p121, %p122
      %p124 = scmp.ne.s32.totalorder %s116, %s119
      %p125 = scmp.eq.s32.totalorder %s12, 0
      %p126 = por %p124, %p125
      %p127 = scmp.ne.s32.totalorder %s116, %s119
      %p128 = scmp.eq.s32.totalorder %s17, 3
      %p129 = por %p127, %p128
      %p130 = scmp.ne.s32.totalorder %s119, %s120
      %p131 = scmp.eq.s32.totalorder %s17, 0
      %p132 = por %p130, %p131
      %p133 = scmp.ne.s32.totalorder %s119, %s120
      %p134 = scmp.eq.s32.totalorder %s18, 3
      %p135 = por %p133, %p134
      %p137 = scmp.ne.s32.totalorder %s120, %s136
      %p138 = scmp.eq.s32.totalorder %s18, 0
      %p139 = por %p137, %p138
      %s140 = ssub.s32 %s19, %s31
      %s141 = ssub.s32 %s20, %s27
      %s142 = sor.u32 %s140, %s141
      %p143 = scmp.eq.s32.totalorder %s142, 0
      %s145 = sadd.s32 %s144, 1
      %s146 = scalar_select %p143, %s144, %s145
      %p149 = pneg %p143
      %p150 = scmp.eq.s32.totalorder %s12, 3
      %p151 = por %p149, %p150
      %p152 = scmp.ne.s32.totalorder %s144, %s147
      %p153 = scmp.eq.s32.totalorder %s12, 0
      %p154 = por %p152, %p153
      %p155 = scmp.ne.s32.totalorder %s144, %s147
      %p156 = scmp.eq.s32.totalorder %s17, 3
      %p157 = por %p155, %p156
      %p158 = scmp.ne.s32.totalorder %s147, %s148
      %p159 = scmp.eq.s32.totalorder %s17, 0
      %p160 = por %p158, %p159
      %p161 = scmp.ne.s32.totalorder %s147, %s148
      %p162 = scmp.eq.s32.totalorder %s18, 3
      %p163 = por %p161, %p162
      %p165 = scmp.ne.s32.totalorder %s148, %s164
      %p166 = scmp.eq.s32.totalorder %s18, 0
      %p167 = por %p165, %p166
      %s168 = ssub.s32 %s19, %s31
      %s169 = ssub.s32 %s20, %s27
      %s170 = sor.u32 %s168, %s169
      %p171 = scmp.eq.s32.totalorder %s170, 0
      %s173 = sadd.s32 %s172, 1
      %s174 = scalar_select %p171, %s172, %s173
      %p177 = pneg %p171
      %p178 = scmp.eq.s32.totalorder %s12, 3
      %p179 = por %p177, %p178
      %p180 = scmp.ne.s32.totalorder %s172, %s175
      %p181 = scmp.eq.s32.totalorder %s12, 0
      %p182 = por %p180, %p181
      %p183 = scmp.ne.s32.totalorder %s172, %s175
      %p184 = scmp.eq.s32.totalorder %s17, 3
      %p185 = por %p183, %p184
      %p186 = scmp.ne.s32.totalorder %s175, %s176
      %p187 = scmp.eq.s32.totalorder %s17, 0
      %p188 = por %p186, %p187
      %p189 = scmp.ne.s32.totalorder %s175, %s176
      %p190 = scmp.eq.s32.totalorder %s18, 3
      %p191 = por %p189, %p190
      %p193 = scmp.ne.s32.totalorder %s176, %s192
      %p194 = scmp.eq.s32.totalorder %s18, 0
      %p195 = por %p193, %p194
      %p196 = scmp.le.s32.totalorder 1, %s12
      %p197 = scmp.lt.s32.totalorder %s12, 5
      %p198 = pnand %p196, %p197
      %p199 = pneg %p198
      // Predicated region
      $region9: #{single_key_attention_forward.1} parent=5 // pred_check
        _
      $region10: #{single_key_attention_forward.1} parent=5 // pred_check_branch
        %201 = sbr.rel (%p198) target = $region12
      $region11: #{single_key_attention_forward.1} parent=5 // pred_region
        %s202 = ssub.s32 %s12, 1
      $region12: #{single_key_attention_forward.1} parent=5 // pred_fallthru
        _
      %p203 = scmp.lt.s32.totalorder %s12, 4
      // Predicated region
      $region13: #{single_key_attention_forward.1} parent=5 // pred_check
        %p204 = pneg %p203
      $region14: #{single_key_attention_forward.1} parent=5 // pred_check_branch
        %206 = sbr.rel (%p204) target = $region16
      $region15: #{single_key_attention_forward.1} parent=5 // pred_region
        // Predicated region
        $region17: #{single_key_attention_forward.1} parent=15 // pred_check
          %p207 = pneg %p46
        $region18: #{single_key_attention_forward.1} parent=15 // pred_check_branch
          %209 = sbr.rel (%p207) target = $region20
        $region19: #{single_key_attention_forward.1} parent=15 // pred_region
          %s210 = sand.u32 %s36, 1
          %s211 = sand.u32 %s36, 1
          %s212 = smul.addr %s211, 32
          %s213 = scalar_lea.vmem [#allocation2], %s212
          %s214 = smul.addr %s19, 8
          %s215 = sadd.s32 %s20, %s214
          %s216 = smul.addr %s215, 8
          %s217 = scalar_lea.vmem %s0, %s216
          // Predicated region
          $region21: #{single_key_attention_forward.1} parent=19 // pred_check
            _
          $region22: #{single_key_attention_forward.1} parent=19 // pred_check_branch
            %219 = sbr.rel (0) target = $region24
          $region23: #{single_key_attention_forward.1} parent=19 // pred_region
            // Predicated region
            $region25: #{single_key_attention_forward.1} parent=23 // pred_check
              _
            $region26: #{single_key_attention_forward.1} parent=23 // pred_check_branch
              %221 = sbr.rel (0) target = $region28
            $region27: #{single_key_attention_forward.1} parent=23 // pred_region
              // Predicated region
              $region40: #{single_key_attention_forward.1} parent=27 // pred_check
                _
              $region41: #{single_key_attention_forward.1} parent=27 // pred_check_branch
                %243 = sbr.rel (0) target = $region43
              $region42: #{single_key_attention_forward.1} parent=27 // pred_region
                loop: start=0, step=1, limit=1
                $region44: #{single_key_attention_forward.1} parent=42 // loop_pre_header
                  _
                $region45: #{single_key_attention_forward.1} parent=42 // loop_header
                  %s245 = sphi 0, %s249
                  %p246 = scmp.ge.s32.totalorder %s245, 1
                  %s250 = sphi %s217, %s217
                  %s251 = sphi %s213, %s213
                $region46: #{single_key_attention_forward.1} parent=42 // loop_header_branch
                  %248 = sbr.rel (%p246) target = $region50
                $region47: #{single_key_attention_forward.1} parent=42 // loop_body
                  %v252 = vld [vmem:[%s250] sm:$0xff]
                  %253 = vst [vmem:[%s251] sm:$0xff] %v252
                  %v254 = vld [vmem:[%s250 + $0x10] sm:$0xff]
                  %255 = vst [vmem:[%s251 + $0x8] sm:$0xff] %v254
                  %v256 = vld [vmem:[%s250 + $0x20] sm:$0xff]
                  %257 = vst [vmem:[%s251 + $0x10] sm:$0xff] %v256
                  %v258 = vld [vmem:[%s250 + $0x30] sm:$0xff]
                  %259 = vst [vmem:[%s251 + $0x18] sm:$0xff] %v258
                $region48: #{single_key_attention_forward.1} parent=42 // loop_footer
                  %s249 = sadd.s32 1, %s245
                $region49: #{single_key_attention_forward.1} parent=42 // loop_footer_branch
                  %244 = sbr.rel target = $region45
                $region50: #{single_key_attention_forward.1} parent=42 // loop_exit
                  _
              $region43: #{single_key_attention_forward.1} parent=27 // pred_fallthru
                _
              // Predicated region
              $region51: #{single_key_attention_forward.1} parent=27 // pred_check
                _
              $region52: #{single_key_attention_forward.1} parent=27 // pred_check_branch
                %261 = sbr.rel target = $region54
              $region53: #{single_key_attention_forward.1} parent=27 // pred_region
                _
              $region54: #{single_key_attention_forward.1} parent=27 // pred_fallthru
                _
            $region28: #{single_key_attention_forward.1} parent=23 // pred_fallthru
              _
            // Predicated region
            $region29: #{single_key_attention_forward.1} parent=23 // pred_check
              _
            $region30: #{single_key_attention_forward.1} parent=23 // pred_check_branch
              %223 = sbr.rel target = $region32
            $region31: #{single_key_attention_forward.1} parent=23 // pred_region
              %s225 = ssub.s32 256, 1
              loop: start=0, step=1, limit=1
              $region33: #{single_key_attention_forward.1} parent=31 // loop_pre_header
                _
              $region34: #{single_key_attention_forward.1} parent=31 // loop_header
                %s227 = sphi 0, %s231
                %p228 = scmp.ge.s32.totalorder %s227, 1
                %s232 = sphi %s217, %s217
                %s233 = sphi %s213, %s213
              $region35: #{single_key_attention_forward.1} parent=31 // loop_header_branch
                %230 = sbr.rel (%p228) target = $region39
              $region36: #{single_key_attention_forward.1} parent=31 // loop_body
                %v234 = vld [vmem:[%s232] sm:%s225]
                %235 = vst [vmem:[%s233] sm:%s225] %v234
                %v236 = vld [vmem:[%s232 + $0x10] sm:%s225]
                %237 = vst [vmem:[%s233 + $0x8] sm:%s225] %v236
                %v238 = vld [vmem:[%s232 + $0x20] sm:%s225]
                %239 = vst [vmem:[%s233 + $0x10] sm:%s225] %v238
                %v240 = vld [vmem:[%s232 + $0x30] sm:%s225]
                %241 = vst [vmem:[%s233 + $0x18] sm:%s225] %v240
              $region37: #{single_key_attention_forward.1} parent=31 // loop_footer
                %s231 = sadd.s32 1, %s227
              $region38: #{single_key_attention_forward.1} parent=31 // loop_footer_branch
                %226 = sbr.rel target = $region34
              $region39: #{single_key_attention_forward.1} parent=31 // loop_exit
                _
            $region32: #{single_key_attention_forward.1} parent=23 // pred_fallthru
              _
          $region24: #{single_key_attention_forward.1} parent=19 // pred_fallthru
            _
          %262 = vnop
        $region20: #{single_key_attention_forward.1} parent=15 // pred_fallthru
          _
        // Predicated region
        $region55: #{single_key_attention_forward.1} parent=15 // pred_check
          %p263 = pneg %p72
        $region56: #{single_key_attention_forward.1} parent=15 // pred_check_branch
          %265 = sbr.rel (%p263) target = $region58
        $region57: #{single_key_attention_forward.1} parent=15 // pred_region
          %p266 = scmp.lt.s32.totalorder %s19, 1
          %s267 = scalar_select %p266, %s19, 1
          %s268 = smul.addr %s267, 8
          %s269 = scalar_lea.vmem %s1, %s268
        $region58: #{single_key_attention_forward.1} parent=15 // pred_fallthru
          _
        // Predicated region
        $region59: #{single_key_attention_forward.1} parent=15 // pred_check
          %p270 = pneg %p98
        $region60: #{single_key_attention_forward.1} parent=15 // pred_check_branch
          %272 = sbr.rel (%p270) target = $region62
        $region61: #{single_key_attention_forward.1} parent=15 // pred_region
          %p273 = scmp.lt.s32.totalorder %s19, 1
          %s274 = scalar_select %p273, %s19, 1
          %s275 = smul.addr %s274, 8
          %s276 = scalar_lea.vmem %s2, %s275
        $region62: #{single_key_attention_forward.1} parent=15 // pred_fallthru
          _
      $region16: #{single_key_attention_forward.1} parent=5 // pred_fallthru
        _
      %p277 = scmp.le.s32.totalorder 1, %s12
      %p278 = scmp.lt.s32.totalorder %s12, 5
      %p279 = pnand %p277, %p278
      %p280 = pneg %p279
      // Predicated region
      $region63: #{single_key_attention_forward.1} parent=5 // pred_check
        _
      $region64: #{single_key_attention_forward.1} parent=5 // pred_check_branch
        %282 = sbr.rel (%p279) target = $region66
      $region65: #{single_key_attention_forward.1} parent=5 // pred_region
        %s283 = ssub.s32 %s12, 1
        %s284 = sand.u32 %s39, 1
        %s285 = sand.u32 %s39, 1
        %s286 = smul.addr %s285, 32
        %s287 = scalar_lea.vmem [#allocation2], %s286
        // Predicated region
        $region67: #{single_key_attention_forward.1} parent=65 // pred_check
          %p288 = pneg %p52
        $region68: #{single_key_attention_forward.1} parent=65 // pred_check_branch
          %290 = sbr.rel (%p288) target = $region70
        $region69: #{single_key_attention_forward.1} parent=65 // pred_region
          _
        $region70: #{single_key_attention_forward.1} parent=65 // pred_fallthru
          _
        %s291 = sand.u32 %s39, 1
        %s292 = sand.u32 %s39, 1
        %s293 = smul.addr %s292, 32
        %s294 = scalar_lea.vmem [#allocation2], %s293
        %p295 = pneg %p52
        %p296 = pneg %p49
        %p297 = scmp.lt.s32.totalorder %s21, 1
        %s298 = scalar_select %p297, %s21, 1
        %s299 = smul.addr %s298, 8
        %s300 = scalar_lea.vmem %s1, %s299
        %p301 = pneg %p78
        %p302 = pneg %p75
        %p303 = scmp.lt.s32.totalorder %s21, 1
        %s304 = scalar_select %p303, %s21, 1
        %s305 = smul.addr %s304, 8
        %s306 = scalar_lea.vmem %s2, %s305
        %p307 = pneg %p104
        %p308 = pneg %p101
        %p309 = pneg %p132
        %p310 = pneg %p129
        %s311 = sand.u32 %s119, 1
        %s312 = sand.u32 %s119, 1
        %s313 = smul.addr %s312, 32
        %s314 = scalar_lea.vmem [#allocation3], %s313
        %p315 = pneg %p160
        %p316 = pneg %p157
        %p317 = scmp.lt.s32.totalorder %s21, 1
        %s318 = scalar_select %p317, %s21, 1
        %p319 = scmp.lt.s32.totalorder %s22, 1
        %s320 = scalar_select %p319, %s22, 1
        %s321 = smul.addr %s318, 2
        %s322 = sadd.s32 %s320, %s321
        %s323 = smul.addr %s322, 8
        %s324 = scalar_lea.vmem %s4, %s323
        %p325 = pneg %p188
        %p326 = pneg %p185
        %p327 = scmp.lt.s32.totalorder %s21, 1
        %s328 = scalar_select %p327, %s21, 1
        %p329 = scmp.lt.s32.totalorder %s22, 1
        %s330 = scalar_select %p329, %s22, 1
        %s331 = smul.addr %s328, 2
        %s332 = sadd.s32 %s330, %s331
        %s333 = scalar_lea.vmem %s5, %s332
        %p334 = scmp.lt.s32.totalorder %s21, 1
        %s335 = scalar_select %p334, %s21, 1
        %s336 = smul.addr %s335, 8
        %s337 = scalar_lea.vmem %s1, %s336
        %p338 = scmp.lt.s32.totalorder %s21, 1
        %s339 = scalar_select %p338, %s21, 1
        %s340 = smul.addr %s339, 8
        %s341 = scalar_lea.vmem %s2, %s340
        %p342 = scmp.lt.s32.totalorder %s21, 1
        %s343 = scalar_select %p342, %s21, 1
        %p344 = scmp.lt.s32.totalorder %s22, 1
        %s345 = scalar_select %p344, %s22, 1
        %s346 = smul.addr %s343, 2
        %s347 = sadd.s32 %s345, %s346
        %s348 = smul.addr %s347, 8
        %s349 = scalar_lea.vmem %s4, %s348
        %p350 = scmp.lt.s32.totalorder %s21, 1
        %s351 = scalar_select %p350, %s21, 1
        %p352 = scmp.lt.s32.totalorder %s22, 1
        %s353 = scalar_select %p352, %s22, 1
        %s354 = smul.addr %s351, 2
        %s355 = sadd.s32 %s353, %s354
        %s356 = scalar_lea.vmem %s5, %s355
        %v357 = vld [vmem:[%s287] sm:$0xff]
        %v358 = vld [vmem:[%s287 + $0x8] sm:$0xff]
        %v359 = vld [vmem:[%s287 + $0x10] sm:$0xff]
        %v360 = vld [vmem:[%s287 + $0x18] sm:$0xff]
        %v361 = vld [vmem:[%s337] sm:$0x3f]
        %v362 = vld [vmem:[%s341] sm:$0x3f]
        %364 = vset.pattern.permute.xlu0 0
        %365 = vperm.xlu0 %364, %v362
        %v366 = vpop.permute.xlu0 %365
        %vm368 = vcmask 261120
        %v370 = vsel %vm368, %v361, 0
        %372 = vmatpush.msra.mxu0 0.0
        %373 = vmatpush.msra.mxu0 0.0
        %374 = vmatpush.msra.mxu0 0.0
        %375 = vmatpush.msra.mxu0 0.0
        %376 = vmatpush.msra.mxu0 0.0
        %377 = vmatpush.msra.mxu0 0.0
        %378 = vmatpush.msra.mxu0 0.0
        %379 = vmatpush.msra.mxu0 0.0
        %380 = vmatpush.msra.mxu0 0.0
        %381 = vmatpush.msra.mxu0 0.0
        %382 = vmatpush.msra.mxu0 0.0
        %383 = vmatpush.msra.mxu0 0.0
        %384 = vmatpush.msra.mxu0 %v360
        %385 = vmatpush.msra.mxu0 %v359
        %386 = vmatpush.msra.mxu0 %v358
        %387 = vmatpush.msra.mxu0 %v357
        %388 = vmatmul.f32.gmra.mxu0 %v370
        %v389 = vpop.f32.mrf.mxu0
        %v390 = vadd.f32 %v366, %v389
        %391 = vdwg.mxu0
        %v392 = vmul.f32 %v390, 0.33333334
        %vm393 = vcmask 1045504
        %v394 = vsel %vm393, %v392, -inf
        %v395 = vrot.slane %v394, 4
        %v396 = vmax.f32 %v394, %v395
        %v397 = vrot.slane %v396, 2
        %v398 = vmax.f32 %v396, %v397
        %v399 = vrot.slane %v398, 1
        %v400 = vmax.f32 %v398, %v399
        %v401 = vsub.f32 %v392, %v400
        %v402 = vmul.f32 %v401, 1.442695
        %v403 = vpow.pop %v402
        %v404 = vsel %vm393, %v403, 0.0
        %v405 = vrot.slane %v404, 4
        %v406 = vadd.f32 %v404, %v405
        %v407 = vrot.slane %v406, 2
        %v408 = vadd.f32 %v406, %v407
        %v409 = vrot.slane %v408, 1
        %v410 = vadd.f32 %v408, %v409
        %v411 = vrcp.pop %v410
        %v412 = vmul.f32 %v410, %v411
        %v413 = vsub.f32 1.0, %v412
        %v414 = vmul.f32 %v411, %v413
        %v415 = vadd.f32 %v411, %v414
        %vm416 = vweird.f32 %v410
        %vm417 = vweird.f32 %v411
        %vm418 = vmor %vm416, %vm417
        %v419 = vsel %vm418, %v411, %v415
        %v420 = vand.u32 2147483647, %v410
        %vm421 = vcmp.eq.f32.partialorder %v420, 8.507059e+37
        %v422 = vand.u32 %v410, 2147483648
        %v423 = vor.u32 1.1754944e-38, %v422
        %v424 = vsel %vm421, %v423, %v419
        %v425 = vmul.f32 %v357, %v424
        %v426 = vmul.f32 %v358, %v424
        %v427 = vmul.f32 %v359, %v424
        %v428 = vmul.f32 %v360, %v424
        %429 = vst [vmem:[%s314] sm:$0xff] %v425
        %430 = vst [vmem:[%s314 + $0x8] sm:$0xff] %v426
        %431 = vst [vmem:[%s314 + $0x10] sm:$0xff] %v427
        %432 = vst [vmem:[%s314 + $0x18] sm:$0xff] %v428
        %433 = vst [vmem:[%s349] sm:$0x3f] %v390
        %434 = vst [vmem:[%s356] sm:$0x1] %v424
        %s435 = sand.u32 %s119, 1
        %s436 = sand.u32 %s119, 1
        %s437 = smul.addr %s436, 32
        %s438 = scalar_lea.vmem [#allocation3], %s437
        %p439 = scmp.lt.s32.totalorder %s21, 1
        %s440 = scalar_select %p439, %s21, 1
        %p441 = scmp.lt.s32.totalorder %s22, 1
        %s442 = scalar_select %p441, %s22, 1
        %s443 = smul.addr %s440, 2
        %s444 = sadd.s32 %s442, %s443
        %s445 = smul.addr %s444, 8
        %s446 = scalar_lea.vmem %s4, %s445
        %p447 = scmp.lt.s32.totalorder %s21, 1
        %s448 = scalar_select %p447, %s21, 1
        %p449 = scmp.lt.s32.totalorder %s22, 1
        %s450 = scalar_select %p449, %s22, 1
        %s451 = smul.addr %s448, 2
        %s452 = sadd.s32 %s450, %s451
        %s453 = scalar_lea.vmem %s5, %s452
        // Predicated region
        $region71: #{single_key_attention_forward.1} parent=65 // pred_check
          %p454 = pneg %p129
        $region72: #{single_key_attention_forward.1} parent=65 // pred_check_branch
          %456 = sbr.rel (%p454) target = $region74
        $region73: #{single_key_attention_forward.1} parent=65 // pred_region
          %s457 = smul.addr %s21, 8
          %s458 = sadd.s32 %s22, %s457
          %s459 = smul.addr %s458, 8
          %s460 = scalar_lea.vmem %s3, %s459
          // Predicated region
          $region75: #{single_key_attention_forward.1} parent=73 // pred_check
            _
          $region76: #{single_key_attention_forward.1} parent=73 // pred_check_branch
            %462 = sbr.rel (0) target = $region78
          $region77: #{single_key_attention_forward.1} parent=73 // pred_region
            // Predicated region
            $region79: #{single_key_attention_forward.1} parent=77 // pred_check
              _
            $region80: #{single_key_attention_forward.1} parent=77 // pred_check_branch
              %464 = sbr.rel (0) target = $region82
            $region81: #{single_key_attention_forward.1} parent=77 // pred_region
              // Predicated region
              $region94: #{single_key_attention_forward.1} parent=81 // pred_check
                _
              $region95: #{single_key_attention_forward.1} parent=81 // pred_check_branch
                %486 = sbr.rel (0) target = $region97
              $region96: #{single_key_attention_forward.1} parent=81 // pred_region
                loop: start=0, step=1, limit=1
                $region98: #{single_key_attention_forward.1} parent=96 // loop_pre_header
                  _
                $region99: #{single_key_attention_forward.1} parent=96 // loop_header
                  %s488 = sphi 0, %s492
                  %p489 = scmp.ge.s32.totalorder %s488, 1
                  %s493 = sphi %s438, %s438
                  %s494 = sphi %s460, %s460
                $region100: #{single_key_attention_forward.1} parent=96 // loop_header_branch
                  %491 = sbr.rel (%p489) target = $region104
                $region101: #{single_key_attention_forward.1} parent=96 // loop_body
                  %v495 = vld [vmem:[%s493] sm:$0xff]
                  %496 = vst [vmem:[%s494] sm:$0xff] %v495
                  %v497 = vld [vmem:[%s493 + $0x8] sm:$0xff]
                  %498 = vst [vmem:[%s494 + $0x10] sm:$0xff] %v497
                  %v499 = vld [vmem:[%s493 + $0x10] sm:$0xff]
                  %500 = vst [vmem:[%s494 + $0x20] sm:$0xff] %v499
                  %v501 = vld [vmem:[%s493 + $0x18] sm:$0xff]
                  %502 = vst [vmem:[%s494 + $0x30] sm:$0xff] %v501
                $region102: #{single_key_attention_forward.1} parent=96 // loop_footer
                  %s492 = sadd.s32 1, %s488
                $region103: #{single_key_attention_forward.1} parent=96 // loop_footer_branch
                  %487 = sbr.rel target = $region99
                $region104: #{single_key_attention_forward.1} parent=96 // loop_exit
                  _
              $region97: #{single_key_attention_forward.1} parent=81 // pred_fallthru
                _
              // Predicated region
              $region105: #{single_key_attention_forward.1} parent=81 // pred_check
                _
              $region106: #{single_key_attention_forward.1} parent=81 // pred_check_branch
                %504 = sbr.rel target = $region108
              $region107: #{single_key_attention_forward.1} parent=81 // pred_region
                _
              $region108: #{single_key_attention_forward.1} parent=81 // pred_fallthru
                _
            $region82: #{single_key_attention_forward.1} parent=77 // pred_fallthru
              _
            // Predicated region
            $region83: #{single_key_attention_forward.1} parent=77 // pred_check
              _
            $region84: #{single_key_attention_forward.1} parent=77 // pred_check_branch
              %466 = sbr.rel target = $region86
            $region85: #{single_key_attention_forward.1} parent=77 // pred_region
              %s468 = ssub.s32 256, 1
              loop: start=0, step=1, limit=1
              $region87: #{single_key_attention_forward.1} parent=85 // loop_pre_header
                _
              $region88: #{single_key_attention_forward.1} parent=85 // loop_header
                %s470 = sphi 0, %s474
                %p471 = scmp.ge.s32.totalorder %s470, 1
                %s475 = sphi %s438, %s438
                %s476 = sphi %s460, %s460
              $region89: #{single_key_attention_forward.1} parent=85 // loop_header_branch
                %473 = sbr.rel (%p471) target = $region93
              $region90: #{single_key_attention_forward.1} parent=85 // loop_body
                %v477 = vld [vmem:[%s475] sm:%s468]
                %478 = vst [vmem:[%s476] sm:%s468] %v477
                %v479 = vld [vmem:[%s475 + $0x8] sm:%s468]
                %480 = vst [vmem:[%s476 + $0x10] sm:%s468] %v479
                %v481 = vld [vmem:[%s475 + $0x10] sm:%s468]
                %482 = vst [vmem:[%s476 + $0x20] sm:%s468] %v481
                %v483 = vld [vmem:[%s475 + $0x18] sm:%s468]
                %484 = vst [vmem:[%s476 + $0x30] sm:%s468] %v483
              $region91: #{single_key_attention_forward.1} parent=85 // loop_footer
                %s474 = sadd.s32 1, %s470
              $region92: #{single_key_attention_forward.1} parent=85 // loop_footer_branch
                %469 = sbr.rel target = $region88
              $region93: #{single_key_attention_forward.1} parent=85 // loop_exit
                _
            $region86: #{single_key_attention_forward.1} parent=77 // pred_fallthru
              _
          $region78: #{single_key_attention_forward.1} parent=73 // pred_fallthru
            _
          %505 = vnop
        $region74: #{single_key_attention_forward.1} parent=65 // pred_fallthru
          _
        // Predicated region
        $region109: #{single_key_attention_forward.1} parent=65 // pred_check
          %p506 = pneg %p157
        $region110: #{single_key_attention_forward.1} parent=65 // pred_check_branch
          %508 = sbr.rel (%p506) target = $region112
        $region111: #{single_key_attention_forward.1} parent=65 // pred_region
          _
        $region112: #{single_key_attention_forward.1} parent=65 // pred_fallthru
          _
        // Predicated region
        $region113: #{single_key_attention_forward.1} parent=65 // pred_check
          %p509 = pneg %p185
        $region114: #{single_key_attention_forward.1} parent=65 // pred_check_branch
          %511 = sbr.rel (%p509) target = $region116
        $region115: #{single_key_attention_forward.1} parent=65 // pred_region
          _
        $region116: #{single_key_attention_forward.1} parent=65 // pred_fallthru
          _
      $region66: #{single_key_attention_forward.1} parent=5 // pred_fallthru
        _
      %p512 = scmp.le.s32.totalorder 2, %s12
      // Predicated region
      $region117: #{single_key_attention_forward.1} parent=5 // pred_check
        %p513 = pneg %p512
      $region118: #{single_key_attention_forward.1} parent=5 // pred_check_branch
        %515 = sbr.rel (%p513) target = $region120
      $region119: #{single_key_attention_forward.1} parent=5 // pred_region
        %s516 = ssub.s32 %s12, 2
        // Predicated region
        $region121: #{single_key_attention_forward.1} parent=119 // pred_check
          %p517 = pneg %p135
        $region122: #{single_key_attention_forward.1} parent=119 // pred_check_branch
          %519 = sbr.rel (%p517) target = $region124
        $region123: #{single_key_attention_forward.1} parent=119 // pred_region
          %s520 = sand.u32 %s120, 1
          %s521 = sand.u32 %s120, 1
          %s522 = smul.addr %s521, 32
          %s523 = scalar_lea.vmem [#allocation3], %s522
        $region124: #{single_key_attention_forward.1} parent=119 // pred_fallthru
          _
        // Predicated region
        $region125: #{single_key_attention_forward.1} parent=119 // pred_check
          %p524 = pneg %p163
        $region126: #{single_key_attention_forward.1} parent=119 // pred_check_branch
          %526 = sbr.rel (%p524) target = $region128
        $region127: #{single_key_attention_forward.1} parent=119 // pred_region
          %p527 = scmp.lt.s32.totalorder %s23, 1
          %s528 = scalar_select %p527, %s23, 1
          %p529 = scmp.lt.s32.totalorder %s24, 1
          %s530 = scalar_select %p529, %s24, 1
          %s531 = smul.addr %s528, 2
          %s532 = sadd.s32 %s530, %s531
          %s533 = smul.addr %s532, 8
          %s534 = scalar_lea.vmem %s4, %s533
        $region128: #{single_key_attention_forward.1} parent=119 // pred_fallthru
          _
        // Predicated region
        $region129: #{single_key_attention_forward.1} parent=119 // pred_check
          %p535 = pneg %p191
        $region130: #{single_key_attention_forward.1} parent=119 // pred_check_branch
          %537 = sbr.rel (%p535) target = $region132
        $region131: #{single_key_attention_forward.1} parent=119 // pred_region
          %p538 = scmp.lt.s32.totalorder %s23, 1
          %s539 = scalar_select %p538, %s23, 1
          %p540 = scmp.lt.s32.totalorder %s24, 1
          %s541 = scalar_select %p540, %s24, 1
          %s542 = smul.addr %s539, 2
          %s543 = sadd.s32 %s541, %s542
          %s544 = scalar_lea.vmem %s5, %s543
        $region132: #{single_key_attention_forward.1} parent=119 // pred_fallthru
          _
      $region120: #{single_key_attention_forward.1} parent=5 // pred_fallthru
        _
    $region6: #{single_key_attention_forward.1} parent=1 // loop_footer
      %s16 = sadd.s32 1, %s12
    $region7: #{single_key_attention_forward.1} parent=1 // loop_footer_branch
      %11 = sbr.rel target = $region3
    $region8: #{single_key_attention_forward.1} parent=1 // loop_exit
      _

</llo_original>
